<compile_context>
chip_gen: v7x
topology: tpu7x:2x2x1
jax: 0.10.0
libtpu: 0.0.40
codegen_flags: <defaults>
</compile_context>

<pallas_src>
import math

import jax
import jax.numpy as jnp
from jax.experimental import pallas as pl
from jax.experimental.pallas import tpu as pltpu


def _round_up(x, m):
    return (x + m - 1) // m * m


# ------------------------- tiled GEMM + bias kernel --------------------------
def _matmul_bias_kernel(x_ref, w_ref, b_ref, o_ref, acc_ref):
    @pl.when(pl.program_id(2) == 0)
    def _():
        acc_ref[...] = jnp.zeros_like(acc_ref)

    acc_ref[...] += jnp.dot(x_ref[...], w_ref[...],
                            preferred_element_type=jnp.float32)

    @pl.when(pl.program_id(2) == pl.num_programs(2) - 1)
    def _():
        o_ref[...] = (acc_ref[...] + b_ref[...]).astype(o_ref.dtype)


def matmul_bias(x, w, b, *, out_dtype=jnp.float32, bm=512, bn=1024, bk=1024):
    """(M,K) @ (K,N) + (N,) -> (M,N). bf16 operands, f32 accumulation."""
    M, K = x.shape
    K2, N = w.shape
    assert K == K2 and b.shape == (N,)

    # bf16 packs 2 rows per sublane -> round M tiles to 16 for dense stores.
    tm = min(bm, _round_up(M, 16))
    tn = min(bn, _round_up(N, 128))
    tk = min(bk, _round_up(K, 128))
    Mp, Np, Kp = _round_up(M, tm), _round_up(N, tn), _round_up(K, tk)

    xp = jnp.pad(x, ((0, Mp - M), (0, Kp - K))).astype(jnp.bfloat16)
    wp = jnp.pad(w, ((0, Kp - K), (0, Np - N))).astype(jnp.bfloat16)
    bp = jnp.pad(b, (0, Np - N)).astype(jnp.float32).reshape(1, Np)

    out_isize = 2 if out_dtype == jnp.bfloat16 else 4
    est = (2 * tm * tk * 2          # x blocks, double-buffered bf16
           + 2 * tk * tn * 2        # w blocks, double-buffered bf16
           + 2 * 1 * tn * 4         # bias blocks
           + 2 * tm * tn * out_isize  # output blocks
           + tm * tn * 4)           # f32 accumulator scratch
    vmem_limit = min(max(2 * est + (4 << 20), 16 << 20), 48 << 20)

    out = pl.pallas_call(
        _matmul_bias_kernel,
        out_shape=jax.ShapeDtypeStruct((Mp, Np), out_dtype),
        grid_spec=pltpu.PrefetchScalarGridSpec(
            num_scalar_prefetch=0,
            grid=(Mp // tm, Np // tn, Kp // tk),
            in_specs=[
                pl.BlockSpec((tm, tk), lambda i, j, k: (i, k)),
                pl.BlockSpec((tk, tn), lambda i, j, k: (k, j)),
                pl.BlockSpec((1, tn), lambda i, j, k: (0, j)),
            ],
            out_specs=pl.BlockSpec((tm, tn), lambda i, j, k: (i, j)),
            scratch_shapes=[pltpu.VMEM((tm, tn), jnp.float32)],
        ),
        compiler_params=pltpu.CompilerParams(
            dimension_semantics=("parallel", "parallel", "arbitrary"),
            vmem_limit_bytes=vmem_limit),
    )(xp, wp, bp)
    return out[:M, :N]


# ---------------------- recurrent (h @ W_hh only) kernel ----------------------
def _lstm_recurrent_kernel(gx_ref, whh_hbm, out_ref,
                           whh_vmem, h_sc, c_sc, dma_sem):
    # gx_ref  : (Tc, bt, 4*Hp) bf16  precomputed x @ W_ih + (b_ih + b_hh),
    #                                gate order [i, f, o, g] per Hp block
    # whh_hbm : (Hp, 4*Hp)     bf16  hidden->gates weights, raw HBM ref
    # out_ref : (Tc, bt, Hp)   bf16  hidden states for this (batch, time) tile
    # whh_vmem: (Hp, 4*Hp)     bf16  single-buffered W_hh copy (scratch)
    # h_sc    : (bt, Hp)       bf16  recurrent h state (fed straight to MXU)
    # c_sc    : (bt, Hp)       f32   recurrent c state
    @pl.when(pl.program_id(1) == 0)   # first time chunk of this batch tile
    def _():
        # Single-buffer W_hh: one DMA per batch tile (per core on v7x)
        # instead of 2x double-buffered BlockSpec copies every grid step.
        cp = pltpu.make_async_copy(whh_hbm, whh_vmem, dma_sem)
        cp.start()
        cp.wait()
        h_sc[...] = jnp.zeros_like(h_sc)
        c_sc[...] = jnp.zeros_like(c_sc)

    hdim = h_sc.shape[1]     # Hp, multiple of 128 -> lane-aligned gate slices
    tc = gx_ref.shape[0]

    def step(t, carry):
        gates = gx_ref[t].astype(jnp.float32) + jnp.dot(
            h_sc[...], whh_vmem[...],
            preferred_element_type=jnp.float32)               # (bt, 4Hp) f32
        sig = jax.nn.sigmoid(gates[:, :3 * hdim])             # [i | f | o]
        g_g = jnp.tanh(gates[:, 3 * hdim:])                   # g
        i_g = sig[:, :hdim]
        f_g = sig[:, hdim:2 * hdim]
        o_g = sig[:, 2 * hdim:]
        c_new = f_g * c_sc[...] + i_g * g_g
        h_bf = (o_g * jnp.tanh(c_new)).astype(jnp.bfloat16)   # single cast
        c_sc[...] = c_new
        h_sc[...] = h_bf
        out_ref[t] = h_bf
        return carry

    jax.lax.fori_loop(0, tc, step, 0, unroll=8)   # capped unroll


def lstm_recurrent(gx, whh_p, *, tc, bt):
    """gx: (Sp, Bp, 4*Hp) bf16 pre-activations; returns (Sp, Bp, Hp) bf16."""
    Sp, Bp, H4p = gx.shape
    Hp = whh_p.shape[0]
    assert Sp % tc == 0 and Bp % bt == 0

    # Explicit per-kernel VMEM budget (keeps v7x's 64 MiB/TC comfortable).
    est = (2 * tc * bt * H4p * 2      # gx blocks, double-buffered bf16
           + 2 * tc * bt * Hp * 2     # out blocks, double-buffered bf16
           + Hp * H4p * 2             # single-buffered W_hh scratch
           + bt * Hp * (2 + 4))       # h (bf16) + c (f32) state
    vmem_limit = min(max(2 * est + (4 << 20), 16 << 20), 48 << 20)

    return pl.pallas_call(
        _lstm_recurrent_kernel,
        out_shape=jax.ShapeDtypeStruct((Sp, Bp, Hp), jnp.bfloat16),
        grid_spec=pltpu.PrefetchScalarGridSpec(
            num_scalar_prefetch=0,
            grid=(Bp // bt, Sp // tc),          # batch tiles outer, time inner
            in_specs=[
                pl.BlockSpec((tc, bt, H4p), lambda b, s: (s, b, 0)),
                pl.BlockSpec(memory_space=pl.ANY),   # W_hh stays in HBM
            ],
            out_specs=pl.BlockSpec((tc, bt, Hp), lambda b, s: (s, b, 0)),
            scratch_shapes=[
                pltpu.VMEM((Hp, H4p), jnp.bfloat16),   # single-buffered W_hh
                pltpu.VMEM((bt, Hp), jnp.bfloat16),    # h state
                pltpu.VMEM((bt, Hp), jnp.float32),     # c state
                pltpu.SemaphoreType.DMA,
            ],
        ),
        compiler_params=pltpu.CompilerParams(
            # batch tiles are independent -> parallel (v7x megacore);
            # time is the sequential recurrence -> arbitrary.
            dimension_semantics=("parallel", "arbitrary"),
            vmem_limit_bytes=vmem_limit),
    )(gx, whh_p)


# ------------------------------- module wrapper -------------------------------
class DecoderLSTMPallas:
    # Gate reorder applied to packed weights: PyTorch [i,f,g,o] -> [i,f,o,g]
    # so the three sigmoid gates are one contiguous (Bp, 3Hp) slab per step.
    _GATE_PERM = [0, 1, 3, 2]

    def __init__(self, input_size, hidden_size, vocab_size, num_layers, key,
                 time_chunk=32):
        self.input_size = input_size
        self.hidden_size = hidden_size
        self.vocab_size = vocab_size
        self.num_layers = num_layers
        self.time_chunk = time_chunk

        self.Dp = _round_up(input_size, 128)
        self.Hp = _round_up(hidden_size, 128)
        self.Vp = _round_up(vocab_size, 128)

        keys = jax.random.split(key, 2 + 4 * num_layers + 2)
        k = 1.0 / math.sqrt(hidden_size)
        H, Hp = hidden_size, self.Hp
        perm = jnp.array(self._GATE_PERM, jnp.int32)

        # nn.Embedding(vocab_size, input_size)
        self.embedding = jax.random.normal(
            keys[0], (vocab_size, input_size), jnp.float32)

        def pack_gate_cols(w_t):
            # (Din, 4H) -> reorder gates to [i,f,o,g] -> pad each gate to Hp.
            din = w_t.shape[0]
            w4 = w_t.reshape(din, 4, H)[:, perm, :]
            w4 = jnp.pad(w4, ((0, 0), (0, 0), (0, Hp - H)))
            return w4.reshape(din, 4 * Hp)

        # nn.LSTM(input_size, hidden_size, num_layers, batch_first=True)
        self.lstm_params_ref = []    # f32, un-padded, PyTorch order (reference)
        self.lstm_params_pal = []    # padded+reordered bf16 weights / f32 bias
        for layer in range(num_layers):
            d_in = input_size if layer == 0 else hidden_size
            d_in_p = self.Dp if layer == 0 else Hp
            kw = keys[2 + 4 * layer:2 + 4 * layer + 4]
            w_ih = jax.random.uniform(kw[0], (4 * H, d_in), jnp.float32, -k, k)
            w_hh = jax.random.uniform(kw[1], (4 * H, H), jnp.float32, -k, k)
            b_ih = jax.random.uniform(kw[2], (4 * H,), jnp.float32, -k, k)
            b_hh = jax.random.uniform(kw[3], (4 * H,), jnp.float32, -k, k)
            wih_t, whh_t, bias = w_ih.T, w_hh.T, b_ih + b_hh
            self.lstm_params_ref.append((wih_t, whh_t, bias))

            wih_p = jnp.pad(pack_gate_cols(wih_t),
                            ((0, d_in_p - d_in), (0, 0)))
            whh_p = jnp.pad(pack_gate_cols(whh_t), ((0, Hp - H), (0, 0)))
            bias_p = jnp.pad(bias.reshape(4, H)[perm, :],
                             ((0, 0), (0, Hp - H))).reshape(4 * Hp)
            self.lstm_params_pal.append(
                (wih_p.astype(jnp.bfloat16), whh_p.astype(jnp.bfloat16),
                 bias_p.astype(jnp.float32)))

        # nn.Linear(hidden_size, vocab_size)
        ko = keys[2 + 4 * num_layers:]
        w_out = jax.random.uniform(ko[0], (vocab_size, hidden_size),
                                   jnp.float32, -k, k)
        self.w_out_t_ref = w_out.T                                   # (H, V)
        self.b_out = jax.random.uniform(ko[1], (vocab_size,), jnp.float32, -k, k)
        self.w_out_pad = jnp.pad(
            self.w_out_t_ref,
            ((0, Hp - H), (0, self.Vp - vocab_size))).astype(jnp.bfloat16)
        self.b_out_pad = jnp.pad(self.b_out, (0, self.Vp - vocab_size))

    def forward(self, encoder_outputs, captions, lengths):
        """encoder_outputs: (B, D) f32, captions: (B, T) int32,
        lengths: python list sorted descending (as pack_padded_sequence
        requires by default). Returns (sum(lengths), vocab_size) scores."""
        B, T = captions.shape
        S = T + 1
        D, H, V = self.input_size, self.hidden_size, self.vocab_size

        # 1. embedding lookup + concat encoder features as step 0 (glue).
        word_emb = self.embedding[captions]                        # (B, T, D)
        x = jnp.concatenate([encoder_outputs[:, None, :], word_emb], axis=1)
        x_seq = jnp.transpose(x, (1, 0, 2))                        # (S, B, D)

        # 2. pad to TPU-friendly shapes. B -> multiple of 16 (bf16 packs two
        #    rows per sublane -> unmasked stores), D/H -> 128k, S -> time chunk.
        Bp = _round_up(B, 16)
        tc = min(self.time_chunk, S)
        Sp = _round_up(S, tc)
        x_pad = jnp.pad(x_seq, ((0, Sp - S), (0, Bp - B), (0, self.Dp - D)))
        h2d = x_pad.reshape(Sp * Bp, self.Dp).astype(jnp.bfloat16)

        # Batch tiling: >=2 tiles when big enough -> v7x megacore parallelism.
        bt = Bp // 2 if (Bp >= 32 and (Bp // 2) % 16 == 0) else Bp

        # 3. multi-layer LSTM: one big bf16 GEMM for x@W_ih+b (gx emitted in
        #    bf16 to halve its HBM traffic), then the chunked recurrence.
        for (wih_p, whh_p, bias_p) in self.lstm_params_pal:
            gx = matmul_bias(h2d, wih_p, bias_p, out_dtype=jnp.bfloat16)
            gx = gx.reshape(Sp, Bp, 4 * self.Hp)
            h_seq = lstm_recurrent(gx, whh_p, tc=tc, bt=bt)        # (Sp,Bp,Hp)
            h2d = h_seq.reshape(Sp * Bp, self.Hp)                  # bf16

        h_seq = h2d.reshape(Sp, Bp, self.Hp)

        # 4. pack_padded_sequence ordering: time-major over valid positions.
        # TODO(synk): indices are built host-side from the python `lengths`
        # list (exactly like pack_padded_sequence); distinct lengths retrace
        # and the gather runs as an XLA gather rather than a Pallas kernel.
        pack_idx = [(t, b) for t in range(S) for b in range(B)
                    if lengths[b] > t]
        t_idx = jnp.array([p[0] for p in pack_idx], jnp.int32)
        b_idx = jnp.array([p[1] for p in pack_idx], jnp.int32)
        packed_h = h_seq[t_idx, b_idx, :]                          # (N, Hp)

        # 5. vocab projection (tiled GEMM, f32 scores).
        scores = matmul_bias(packed_h, self.w_out_pad, self.b_out_pad,
                             out_dtype=jnp.float32)
        return scores[:, :V]


# ---------------------------- pure-JAX f32 reference ---------------------------
def _reference(model, encoder_outputs, captions, lengths):
    B, T = captions.shape
    emb = model.embedding[captions]
    x = jnp.concatenate([encoder_outputs[:, None, :], emb], axis=1)
    h = jnp.transpose(x, (1, 0, 2))
    for (wih_t, whh_t, b) in model.lstm_params_ref:
        H = whh_t.shape[0]

        def step(carry, x_t, wih_t=wih_t, whh_t=whh_t, b=b, H=H):
            hp, cp = carry
            g = x_t @ wih_t + hp @ whh_t + b
            i = jax.nn.sigmoid(g[:, :H])
            f = jax.nn.sigmoid(g[:, H:2 * H])
            gg = jnp.tanh(g[:, 2 * H:3 * H])
            o = jax.nn.sigmoid(g[:, 3 * H:])
            c = f * cp + i * gg
            hn = o * jnp.tanh(c)
            return (hn, c), hn

        init = (jnp.zeros((B, H), jnp.float32), jnp.zeros((B, H), jnp.float32))
        _, h = jax.lax.scan(step, init, h)
    S = T + 1
    pack_idx = [(t, b) for t in range(S) for b in range(B) if lengths[b] > t]
    t_idx = jnp.array([p[0] for p in pack_idx], jnp.int32)
    b_idx = jnp.array([p[1] for p in pack_idx], jnp.int32)
    packed = h[t_idx, b_idx, :]
    return packed @ model.w_out_t_ref + model.b_out


if __name__ == "__main__":
    B, T = 2, 8
    input_size, hidden_size, vocab_size, num_layers = 16, 32, 50, 2
    lengths = [9, 7]  # sorted descending, each <= T + 1

    key = jax.random.PRNGKey(0)
    k_model, k_enc, k_cap = jax.random.split(key, 3)

    model = DecoderLSTMPallas(input_size, hidden_size, vocab_size,
                              num_layers, k_model)
    encoder_outputs = jax.random.normal(k_enc, (B, input_size), jnp.float32)
    captions = jax.random.randint(k_cap, (B, T), 0, vocab_size, jnp.int32)

    scores = model.forward(encoder_outputs, captions, lengths)
    scores = jax.block_until_ready(scores)

    ref = _reference(model, encoder_outputs, captions, lengths)
    assert scores.shape == (sum(lengths), vocab_size)
    max_err = float(jnp.max(jnp.abs(scores - ref)))
    # bf16 matmul operands + bf16 gx/h -> loosened tolerance vs f32 reference.
    assert jnp.allclose(scores, ref, rtol=5e-2, atol=5e-2), max_err

    print("KERNEL_OK")
</pallas_src>

<mosaic_0001>
module attributes {stable_mosaic.version = 11 : i64} {
  func.func @_matmul_bias_kernel(%arg0: i32, %arg1: i32, %arg2: i32, %arg3: memref<144x128xbf16, #tpu.memory_space<vmem>>, %arg4: memref<128x512xbf16, #tpu.memory_space<vmem>>, %arg5: memref<1x512xf32, #tpu.memory_space<vmem>>, %arg6: memref<144x512xbf16, #tpu.memory_space<vmem>>, %arg7: memref<144x512xf32, #tpu.memory_space<vmem>>) attributes {dimension_semantics = [#tpu.dimension_semantics<parallel>, #tpu.dimension_semantics<parallel>, #tpu.dimension_semantics<arbitrary>], iteration_bounds = array<i64: 1, 1, 1>, scalar_prefetch = 0 : i64, scratch_operands = 1 : i64, tpu.core_type = #tpu.core_type<tc>, window_params = [{transform_indices = @transform_0, window_bounds = array<i64: 144, 128>}, {transform_indices = @transform_1, window_bounds = array<i64: 128, 512>}, {transform_indices = @transform_2, window_bounds = array<i64: 1, 512>}, {transform_indices = @transform_3, window_bounds = array<i64: 144, 512>}]} {
    %c0_i32 = arith.constant 0 : i32
    %0 = arith.cmpi eq, %arg2, %c0_i32 : i32
    %1 = arith.extui %0 : i1 to i32
    %c0_i32_0 = arith.constant 0 : i32
    %2 = arith.cmpi ne, %1, %c0_i32_0 : i32
    scf.if %2 {
      %cst_10 = arith.constant 0.000000e+00 : f32
      %12 = vector.broadcast %cst_10 : f32 to vector<144x512xf32>
      %c0_11 = arith.constant 0 : index
      %c0_12 = arith.constant 0 : index
      %13 = vector.load %arg7[%c0_11, %c0_12] : memref<144x512xf32, #tpu.memory_space<vmem>>, vector<144x512xf32>
      tpu.vector_store %arg7[%c0_11, %c0_12], %12 {strides = array<i32>} : memref<144x512xf32, #tpu.memory_space<vmem>>, vector<144x512xf32>,
    } else {
    }
    %c0 = arith.constant 0 : index
    %c0_1 = arith.constant 0 : index
    %3 = vector.load %arg7[%c0, %c0_1] : memref<144x512xf32, #tpu.memory_space<vmem>>, vector<144x512xf32>
    %c0_2 = arith.constant 0 : index
    %c0_3 = arith.constant 0 : index
    %4 = vector.load %arg3[%c0_2, %c0_3] : memref<144x128xbf16, #tpu.memory_space<vmem>>, vector<144x128xbf16>
    %c0_4 = arith.constant 0 : index
    %c0_5 = arith.constant 0 : index
    %5 = vector.load %arg4[%c0_4, %c0_5] : memref<128x512xbf16, #tpu.memory_space<vmem>>, vector<128x512xbf16>
    %cst = arith.constant dense<0.000000e+00> : vector<144x512xf32>
    %6 = tpu.matmul %4, %5, %cst {dimension_numbers = #tpu.dot_dimension_numbers<[1], [0], [0], [1], [0, 0, 1, 1], [], []>} : vector<144x128xbf16>, vector<128x512xbf16>, vector<144x512xf32> -> vector<144x512xf32>
    %7 = arith.addf %3, %6 : vector<144x512xf32>
    %c0_6 = arith.constant 0 : index
    %c0_7 = arith.constant 0 : index
    %8 = vector.load %arg7[%c0_6, %c0_7] : memref<144x512xf32, #tpu.memory_space<vmem>>, vector<144x512xf32>
    tpu.vector_store %arg7[%c0_6, %c0_7], %7 {strides = array<i32>} : memref<144x512xf32, #tpu.memory_space<vmem>>, vector<144x512xf32>,
    %c0_i32_8 = arith.constant 0 : i32
    %9 = arith.cmpi eq, %arg2, %c0_i32_8 : i32
    %10 = arith.extui %9 : i1 to i32
    %c0_i32_9 = arith.constant 0 : i32
    %11 = arith.cmpi ne, %10, %c0_i32_9 : i32
    scf.if %11 {
      %c0_10 = arith.constant 0 : index
      %c0_11 = arith.constant 0 : index
      %12 = vector.load %arg7[%c0_10, %c0_11] : memref<144x512xf32, #tpu.memory_space<vmem>>, vector<144x512xf32>
      %c0_12 = arith.constant 0 : index
      %c0_13 = arith.constant 0 : index
      %13 = vector.load %arg5[%c0_12, %c0_13] : memref<1x512xf32, #tpu.memory_space<vmem>>, vector<1x512xf32>
      %14 = vector.broadcast %13 : vector<1x512xf32> to vector<144x512xf32>
      %15 = arith.addf %12, %14 : vector<144x512xf32>
      %16 = arith.truncf %15 : vector<144x512xf32> to vector<144x512xbf16>
      %c0_14 = arith.constant 0 : index
      %c0_15 = arith.constant 0 : index
      %17 = vector.load %arg6[%c0_14, %c0_15] : memref<144x512xbf16, #tpu.memory_space<vmem>>, vector<144x512xbf16>
      tpu.vector_store %arg6[%c0_14, %c0_15], %16 {strides = array<i32>} : memref<144x512xbf16, #tpu.memory_space<vmem>>, vector<144x512xbf16>,
    } else {
    }
    return
  }
  func.func @transform_0(%arg0: i32, %arg1: i32, %arg2: i32) -> (i32, i32) {
    %c0_i32 = arith.constant 0 : i32
    return %arg0, %arg2 : i32, i32
  }
  func.func @transform_1(%arg0: i32, %arg1: i32, %arg2: i32) -> (i32, i32) {
    %c0_i32 = arith.constant 0 : i32
    return %arg2, %arg1 : i32, i32
  }
  func.func @transform_2(%arg0: i32, %arg1: i32, %arg2: i32) -> (i32, i32) {
    %c0_i32 = arith.constant 0 : i32
    %c0_i32_0 = arith.constant 0 : i32
    return %c0_i32, %arg1 : i32, i32
  }
  func.func @transform_3(%arg0: i32, %arg1: i32, %arg2: i32) -> (i32, i32) {
    %c0_i32 = arith.constant 0 : i32
    return %arg0, %arg1 : i32, i32
  }
}

</mosaic_0001>

<llo_original>
// kernel: tpu_custom_call.1
$region0: #{tpu_custom_call.1}
  #allocation0 [shape = 'u32[]', space=smem, size = 0x4, offset = 0x4, fixed_abs, tag = 'smem constant byte address 0x4 - core index']
  #allocation1 [shape = 'u32[144,128]{1,0:T(1,128)}', space=vmem, size = 0x12000, scoped, tag = 'internal scratch']
  #allocation2 [shape = 'f32[144,512]{1,0:T(8,128)}', space=vmem, size = 0x48000, scoped, tag = 'scratch operand']
  %s0 = inlined_call_operand.hbm [shape: bf16[144,128], index: 0, kind: input, shape index: {}]
  %s1 = inlined_call_operand.hbm [shape: bf16[128,512], index: 1, kind: input, shape index: {}]
  %s2 = inlined_call_operand.vmem [shape: f32[1,512], index: 2, kind: input, shape index: {}]
  %s3 = inlined_call_operand.hbm [shape: bf16[144,512], index: 3, kind: output, shape index: {}]
  %s4 = sld [smem:[#allocation0]]
  $region38: #{tpu_custom_call.1} parent=0
    _
  %s6 = ssub.s32 1, %s4
  %s7 = scalar_select 0, %s6, %s4
  $region1: #{tpu_custom_call.1} parent=0
    #allocation3 [shape = 'u8[36864]{0}', space=vmem, size = 0x9000, scoped, tag = 'input window, operand 0, single buffered']
    #allocation4 [shape = 's32[1]{0}', space=sflag, size = 0x4, scoped, tag = 'scoped memory for tpu_custom_call.1']
    #allocation5 [shape = 's32[1]{0}', space=sflag, size = 0x4, scoped, tag = 'scoped memory for tpu_custom_call.1']
    #allocation6 [shape = 'u8[131072]{0}', space=vmem, size = 0x20000, scoped, tag = 'input window, operand 1, single buffered']
    #allocation7 [shape = 's32[1]{0}', space=sflag, size = 0x4, scoped, tag = 'scoped memory for tpu_custom_call.1']
    #allocation8 [shape = 'u8[147456]{0}', space=vmem, size = 0x24000, scoped, tag = 'output window, operand 0, single buffered']
    %8 = vsyncpa [#allocation4], 0
    %9 = vsyncpa [#allocation7], 0
    %10 = vsyncpa [#allocation5], 0
    // Predicated region
    $region2: #{tpu_custom_call.1} parent=1 // pred_check
      _
    $region3: #{tpu_custom_call.1} parent=1 // pred_check_branch
      %12 = sbr.rel (0) target = $region5
    $region4: #{tpu_custom_call.1} parent=1 // pred_region
      %s14 = ssub.s32 1152, 1152
      %15 = vsyncadd [#allocation4], %s14
      %s16 = sshll.u32 [#allocation3], 4
      %s17 = int_to_ptr.vmem [resolvable:$true] %s16
      %22 = dma.hbm_to_vmem [thread:$0]  %s0, 1152, %s17, [#allocation4], 64, 64, 4
    $region5: #{tpu_custom_call.1} parent=1 // pred_fallthru
      _
    // Predicated region
    $region6: #{tpu_custom_call.1} parent=1 // pred_check
      _
    $region7: #{tpu_custom_call.1} parent=1 // pred_check_branch
      %24 = sbr.rel (0) target = $region9
    $region8: #{tpu_custom_call.1} parent=1 // pred_region
      %s26 = ssub.s32 4096, 4096
      %27 = vsyncadd [#allocation7], %s26
      %s28 = sshll.u32 [#allocation6], 4
      %s29 = int_to_ptr.vmem [resolvable:$true] %s28
      %34 = dma.hbm_to_vmem [thread:$0]  %s1, 4096, %s29, [#allocation7], 256, 256, 16
    $region9: #{tpu_custom_call.1} parent=1 // pred_fallthru
      _
    // Predicated region
    $region10: #{tpu_custom_call.1} parent=1 // pred_check
      _
    $region11: #{tpu_custom_call.1} parent=1 // pred_check_branch
      %36 = sbr.rel (0) target = $region13
    $region12: #{tpu_custom_call.1} parent=1 // pred_region
      _
    $region13: #{tpu_custom_call.1} parent=1 // pred_fallthru
      _
    // Predicated region
    $region14: #{tpu_custom_call.1} parent=1 // pred_check
      _
    $region15: #{tpu_custom_call.1} parent=1 // pred_check_branch
      %38 = sbr.rel (0) target = $region17
    $region16: #{tpu_custom_call.1} parent=1 // pred_region
      %39 = dma.done [#allocation4], 1152
    $region17: #{tpu_custom_call.1} parent=1 // pred_fallthru
      _
    // Predicated region
    $region18: #{tpu_custom_call.1} parent=1 // pred_check
      _
    $region19: #{tpu_custom_call.1} parent=1 // pred_check_branch
      %41 = sbr.rel (0) target = $region21
    $region20: #{tpu_custom_call.1} parent=1 // pred_region
      %42 = dma.done [#allocation7], 4096
    $region21: #{tpu_custom_call.1} parent=1 // pred_fallthru
      _
    %p44 = scmp.eq.s32.totalorder 0, 0
    // Predicated region
    $region22: #{tpu_custom_call.1} parent=1 // pred_check
      %p45 = pneg %p44
    $region23: #{tpu_custom_call.1} parent=1 // pred_check_branch
      %47 = sbr.rel (%p45) target = $region25
    $region24: #{tpu_custom_call.1} parent=1 // pred_region
      %48 = vst [vmem:[#allocation2] sm:$0xff] 0.0
      %49 = vst [vmem:[#allocation2 + $0x8] sm:$0xff] 0.0
      %50 = vst [vmem:[#allocation2 + $0x10] sm:$0xff] 0.0
      %51 = vst [vmem:[#allocation2 + $0x18] sm:$0xff] 0.0
      %52 = vst [vmem:[#allocation2 + $0x20] sm:$0xff] 0.0
      %53 = vst [vmem:[#allocation2 + $0x28] sm:$0xff] 0.0
      %54 = vst [vmem:[#allocation2 + $0x30] sm:$0xff] 0.0
      %55 = vst [vmem:[#allocation2 + $0x38] sm:$0xff] 0.0
      %56 = vst [vmem:[#allocation2 + $0x40] sm:$0xff] 0.0
      %57 = vst [vmem:[#allocation2 + $0x48] sm:$0xff] 0.0
      %58 = vst [vmem:[#allocation2 + $0x50] sm:$0xff] 0.0
      %59 = vst [vmem:[#allocation2 + $0x58] sm:$0xff] 0.0
      %60 = vst [vmem:[#allocation2 + $0x60] sm:$0xff] 0.0
      %61 = vst [vmem:[#allocation2 + $0x68] sm:$0xff] 0.0
      %62 = vst [vmem:[#allocation2 + $0x70] sm:$0xff] 0.0
      %63 = vst [vmem:[#allocation2 + $0x78] sm:$0xff] 0.0
      %64 = vst [vmem:[#allocation2 + $0x80] sm:$0xff] 0.0
      %65 = vst [vmem:[#allocation2 + $0x88] sm:$0xff] 0.0
      %66 = vst [vmem:[#allocation2 + $0x90] sm:$0xff] 0.0
      %67 = vst [vmem:[#allocation2 + $0x98] sm:$0xff] 0.0
      %68 = vst [vmem:[#allocation2 + $0xa0] sm:$0xff] 0.0
      %69 = vst [vmem:[#allocation2 + $0xa8] sm:$0xff] 0.0
      %70 = vst [vmem:[#allocation2 + $0xb0] sm:$0xff] 0.0
      %71 = vst [vmem:[#allocation2 + $0xb8] sm:$0xff] 0.0
      %72 = vst [vmem:[#allocation2 + $0xc0] sm:$0xff] 0.0
      %73 = vst [vmem:[#allocation2 + $0xc8] sm:$0xff] 0.0
      %74 = vst [vmem:[#allocation2 + $0xd0] sm:$0xff] 0.0
      %75 = vst [vmem:[#allocation2 + $0xd8] sm:$0xff] 0.0
      %76 = vst [vmem:[#allocation2 + $0xe0] sm:$0xff] 0.0
      %77 = vst [vmem:[#allocation2 + $0xe8] sm:$0xff] 0.0
      %78 = vst [vmem:[#allocation2 + $0xf0] sm:$0xff] 0.0
      %79 = vst [vmem:[#allocation2 + $0xf8] sm:$0xff] 0.0
      %80 = vst [vmem:[#allocation2 + $0x100] sm:$0xff] 0.0
      %81 = vst [vmem:[#allocation2 + $0x108] sm:$0xff] 0.0
      %82 = vst [vmem:[#allocation2 + $0x110] sm:$0xff] 0.0
      %83 = vst [vmem:[#allocation2 + $0x118] sm:$0xff] 0.0
      %84 = vst [vmem:[#allocation2 + $0x120] sm:$0xff] 0.0
      %85 = vst [vmem:[#allocation2 + $0x128] sm:$0xff] 0.0
      %86 = vst [vmem:[#allocation2 + $0x130] sm:$0xff] 0.0
      %87 = vst [vmem:[#allocation2 + $0x138] sm:$0xff] 0.0
      %88 = vst [vmem:[#allocation2 + $0x140] sm:$0xff] 0.0
      %89 = vst [vmem:[#allocation2 + $0x148] sm:$0xff] 0.0
      %90 = vst [vmem:[#allocation2 + $0x150] sm:$0xff] 0.0
      %91 = vst [vmem:[#allocation2 + $0x158] sm:$0xff] 0.0
      %92 = vst [vmem:[#allocation2 + $0x160] sm:$0xff] 0.0
      %93 = vst [vmem:[#allocation2 + $0x168] sm:$0xff] 0.0
      %94 = vst [vmem:[#allocation2 + $0x170] sm:$0xff] 0.0
      %95 = vst [vmem:[#allocation2 + $0x178] sm:$0xff] 0.0
      %96 = vst [vmem:[#allocation2 + $0x180] sm:$0xff] 0.0
      %97 = vst [vmem:[#allocation2 + $0x188] sm:$0xff] 0.0
      %98 = vst [vmem:[#allocation2 + $0x190] sm:$0xff] 0.0
      %99 = vst [vmem:[#allocation2 + $0x198] sm:$0xff] 0.0
      %100 = vst [vmem:[#allocation2 + $0x1a0] sm:$0xff] 0.0
      %101 = vst [vmem:[#allocation2 + $0x1a8] sm:$0xff] 0.0
      %102 = vst [vmem:[#allocation2 + $0x1b0] sm:$0xff] 0.0
      %103 = vst [vmem:[#allocation2 + $0x1b8] sm:$0xff] 0.0
      %104 = vst [vmem:[#allocation2 + $0x1c0] sm:$0xff] 0.0
      %105 = vst [vmem:[#allocation2 + $0x1c8] sm:$0xff] 0.0
      %106 = vst [vmem:[#allocation2 + $0x1d0] sm:$0xff] 0.0
      %107 = vst [vmem:[#allocation2 + $0x1d8] sm:$0xff] 0.0
      %108 = vst [vmem:[#allocation2 + $0x1e0] sm:$0xff] 0.0
      %109 = vst [vmem:[#allocation2 + $0x1e8] sm:$0xff] 0.0
      %110 = vst [vmem:[#allocation2 + $0x1f0] sm:$0xff] 0.0
      %111 = vst [vmem:[#allocation2 + $0x1f8] sm:$0xff] 0.0
      %112 = vst [vmem:[#allocation2 + $0x200] sm:$0xff] 0.0
      %113 = vst [vmem:[#allocation2 + $0x208] sm:$0xff] 0.0
      %114 = vst [vmem:[#allocation2 + $0x210] sm:$0xff] 0.0
      %115 = vst [vmem:[#allocation2 + $0x218] sm:$0xff] 0.0
      %116 = vst [vmem:[#allocation2 + $0x220] sm:$0xff] 0.0
      %117 = vst [vmem:[#allocation2 + $0x228] sm:$0xff] 0.0
      %118 = vst [vmem:[#allocation2 + $0x230] sm:$0xff] 0.0
      %119 = vst [vmem:[#allocation2 + $0x238] sm:$0xff] 0.0
    $region25: #{tpu_custom_call.1} parent=1 // pred_fallthru
      _
    %v120 = vld [vmem:[#allocation2] sm:$0xff]
    %v121 = vld [vmem:[#allocation2 + $0x8] sm:$0xff]
    %v122 = vld [vmem:[#allocation2 + $0x10] sm:$0xff]
    %v123 = vld [vmem:[#allocation2 + $0x18] sm:$0xff]
    %v124 = vld [vmem:[#allocation2 + $0x20] sm:$0xff]
    %v125 = vld [vmem:[#allocation2 + $0x28] sm:$0xff]
    %v126 = vld [vmem:[#allocation2 + $0x30] sm:$0xff]
    %v127 = vld [vmem:[#allocation2 + $0x38] sm:$0xff]
    %v128 = vld [vmem:[#allocation2 + $0x40] sm:$0xff]
    %v129 = vld [vmem:[#allocation2 + $0x48] sm:$0xff]
    %v130 = vld [vmem:[#allocation2 + $0x50] sm:$0xff]
    %v131 = vld [vmem:[#allocation2 + $0x58] sm:$0xff]
    %v132 = vld [vmem:[#allocation2 + $0x60] sm:$0xff]
    %v133 = vld [vmem:[#allocation2 + $0x68] sm:$0xff]
    %v134 = vld [vmem:[#allocation2 + $0x70] sm:$0xff]
    %v135 = vld [vmem:[#allocation2 + $0x78] sm:$0xff]
    %v136 = vld [vmem:[#allocation2 + $0x80] sm:$0xff]
    %v137 = vld [vmem:[#allocation2 + $0x88] sm:$0xff]
    %v138 = vld [vmem:[#allocation2 + $0x90] sm:$0xff]
    %v139 = vld [vmem:[#allocation2 + $0x98] sm:$0xff]
    %v140 = vld [vmem:[#allocation2 + $0xa0] sm:$0xff]
    %v141 = vld [vmem:[#allocation2 + $0xa8] sm:$0xff]
    %v142 = vld [vmem:[#allocation2 + $0xb0] sm:$0xff]
    %v143 = vld [vmem:[#allocation2 + $0xb8] sm:$0xff]
    %v144 = vld [vmem:[#allocation2 + $0xc0] sm:$0xff]
    %v145 = vld [vmem:[#allocation2 + $0xc8] sm:$0xff]
    %v146 = vld [vmem:[#allocation2 + $0xd0] sm:$0xff]
    %v147 = vld [vmem:[#allocation2 + $0xd8] sm:$0xff]
    %v148 = vld [vmem:[#allocation2 + $0xe0] sm:$0xff]
    %v149 = vld [vmem:[#allocation2 + $0xe8] sm:$0xff]
    %v150 = vld [vmem:[#allocation2 + $0xf0] sm:$0xff]
    %v151 = vld [vmem:[#allocation2 + $0xf8] sm:$0xff]
    %v152 = vld [vmem:[#allocation2 + $0x100] sm:$0xff]
    %v153 = vld [vmem:[#allocation2 + $0x108] sm:$0xff]
    %v154 = vld [vmem:[#allocation2 + $0x110] sm:$0xff]
    %v155 = vld [vmem:[#allocation2 + $0x118] sm:$0xff]
    %v156 = vld [vmem:[#allocation2 + $0x120] sm:$0xff]
    %v157 = vld [vmem:[#allocation2 + $0x128] sm:$0xff]
    %v158 = vld [vmem:[#allocation2 + $0x130] sm:$0xff]
    %v159 = vld [vmem:[#allocation2 + $0x138] sm:$0xff]
    %v160 = vld [vmem:[#allocation2 + $0x140] sm:$0xff]
    %v161 = vld [vmem:[#allocation2 + $0x148] sm:$0xff]
    %v162 = vld [vmem:[#allocation2 + $0x150] sm:$0xff]
    %v163 = vld [vmem:[#allocation2 + $0x158] sm:$0xff]
    %v164 = vld [vmem:[#allocation2 + $0x160] sm:$0xff]
    %v165 = vld [vmem:[#allocation2 + $0x168] sm:$0xff]
    %v166 = vld [vmem:[#allocation2 + $0x170] sm:$0xff]
    %v167 = vld [vmem:[#allocation2 + $0x178] sm:$0xff]
    %v168 = vld [vmem:[#allocation2 + $0x180] sm:$0xff]
    %v169 = vld [vmem:[#allocation2 + $0x188] sm:$0xff]
    %v170 = vld [vmem:[#allocation2 + $0x190] sm:$0xff]
    %v171 = vld [vmem:[#allocation2 + $0x198] sm:$0xff]
    %v172 = vld [vmem:[#allocation2 + $0x1a0] sm:$0xff]
    %v173 = vld [vmem:[#allocation2 + $0x1a8] sm:$0xff]
    %v174 = vld [vmem:[#allocation2 + $0x1b0] sm:$0xff]
    %v175 = vld [vmem:[#allocation2 + $0x1b8] sm:$0xff]
    %v176 = vld [vmem:[#allocation2 + $0x1c0] sm:$0xff]
    %v177 = vld [vmem:[#allocation2 + $0x1c8] sm:$0xff]
    %v178 = vld [vmem:[#allocation2 + $0x1d0] sm:$0xff]
    %v179 = vld [vmem:[#allocation2 + $0x1d8] sm:$0xff]
    %v180 = vld [vmem:[#allocation2 + $0x1e0] sm:$0xff]
    %v181 = vld [vmem:[#allocation2 + $0x1e8] sm:$0xff]
    %v182 = vld [vmem:[#allocation2 + $0x1f0] sm:$0xff]
    %v183 = vld [vmem:[#allocation2 + $0x1f8] sm:$0xff]
    %v184 = vld [vmem:[#allocation2 + $0x200] sm:$0xff]
    %v185 = vld [vmem:[#allocation2 + $0x208] sm:$0xff]
    %v186 = vld [vmem:[#allocation2 + $0x210] sm:$0xff]
    %v187 = vld [vmem:[#allocation2 + $0x218] sm:$0xff]
    %v188 = vld [vmem:[#allocation2 + $0x220] sm:$0xff]
    %v189 = vld [vmem:[#allocation2 + $0x228] sm:$0xff]
    %v190 = vld [vmem:[#allocation2 + $0x230] sm:$0xff]
    %v191 = vld [vmem:[#allocation2 + $0x238] sm:$0xff]
    %v192 = vld [vmem:[#allocation3] sm:$0xf]
    %v193 = vld [vmem:[#allocation3 + $0x4] sm:$0xf]
    %v194 = vld [vmem:[#allocation3 + $0x8] sm:$0xf]
    %v195 = vld [vmem:[#allocation3 + $0xc] sm:$0xf]
    %v196 = vld [vmem:[#allocation3 + $0x10] sm:$0xf]
    %v197 = vld [vmem:[#allocation3 + $0x14] sm:$0xf]
    %v198 = vld [vmem:[#allocation3 + $0x18] sm:$0xf]
    %v199 = vld [vmem:[#allocation3 + $0x1c] sm:$0xf]
    %v200 = vld [vmem:[#allocation3 + $0x20] sm:$0xf]
    %v201 = vld [vmem:[#allocation3 + $0x24] sm:$0xf]
    %v202 = vld [vmem:[#allocation3 + $0x28] sm:$0xf]
    %v203 = vld [vmem:[#allocation3 + $0x2c] sm:$0xf]
    %v204 = vld [vmem:[#allocation3 + $0x30] sm:$0xf]
    %v205 = vld [vmem:[#allocation3 + $0x34] sm:$0xf]
    %v206 = vld [vmem:[#allocation3 + $0x38] sm:$0xf]
    %v207 = vld [vmem:[#allocation3 + $0x3c] sm:$0xf]
    %v208 = vld [vmem:[#allocation3 + $0x40] sm:$0xf]
    %v209 = vld [vmem:[#allocation3 + $0x44] sm:$0xf]
    %v210 = vld [vmem:[#allocation6] sm:$0xff]
    %v211 = vld [vmem:[#allocation6 + $0x8] sm:$0xff]
    %v212 = vld [vmem:[#allocation6 + $0x10] sm:$0xff]
    %v213 = vld [vmem:[#allocation6 + $0x18] sm:$0xff]
    %v214 = vld [vmem:[#allocation6 + $0x20] sm:$0xff]
    %v215 = vld [vmem:[#allocation6 + $0x28] sm:$0xff]
    %v216 = vld [vmem:[#allocation6 + $0x30] sm:$0xff]
    %v217 = vld [vmem:[#allocation6 + $0x38] sm:$0xff]
    %v218 = vld [vmem:[#allocation6 + $0x40] sm:$0xff]
    %v219 = vld [vmem:[#allocation6 + $0x48] sm:$0xff]
    %v220 = vld [vmem:[#allocation6 + $0x50] sm:$0xff]
    %v221 = vld [vmem:[#allocation6 + $0x58] sm:$0xff]
    %v222 = vld [vmem:[#allocation6 + $0x60] sm:$0xff]
    %v223 = vld [vmem:[#allocation6 + $0x68] sm:$0xff]
    %v224 = vld [vmem:[#allocation6 + $0x70] sm:$0xff]
    %v225 = vld [vmem:[#allocation6 + $0x78] sm:$0xff]
    %v226 = vld [vmem:[#allocation6 + $0x80] sm:$0xff]
    %v227 = vld [vmem:[#allocation6 + $0x88] sm:$0xff]
    %v228 = vld [vmem:[#allocation6 + $0x90] sm:$0xff]
    %v229 = vld [vmem:[#allocation6 + $0x98] sm:$0xff]
    %v230 = vld [vmem:[#allocation6 + $0xa0] sm:$0xff]
    %v231 = vld [vmem:[#allocation6 + $0xa8] sm:$0xff]
    %v232 = vld [vmem:[#allocation6 + $0xb0] sm:$0xff]
    %v233 = vld [vmem:[#allocation6 + $0xb8] sm:$0xff]
    %v234 = vld [vmem:[#allocation6 + $0xc0] sm:$0xff]
    %v235 = vld [vmem:[#allocation6 + $0xc8] sm:$0xff]
    %v236 = vld [vmem:[#allocation6 + $0xd0] sm:$0xff]
    %v237 = vld [vmem:[#allocation6 + $0xd8] sm:$0xff]
    %v238 = vld [vmem:[#allocation6 + $0xe0] sm:$0xff]
    %v239 = vld [vmem:[#allocation6 + $0xe8] sm:$0xff]
    %v240 = vld [vmem:[#allocation6 + $0xf0] sm:$0xff]
    %v241 = vld [vmem:[#allocation6 + $0xf8] sm:$0xff]
    %v260 = vunpack.c.l.b16 %v192
    %v261 = vunpack.c.l.b16 %v193
    %v262 = vunpack.c.l.b16 %v194
    %v263 = vunpack.c.l.b16 %v195
    %v264 = vunpack.c.l.b16 %v196
    %v265 = vunpack.c.l.b16 %v197
    %v266 = vunpack.c.l.b16 %v198
    %v267 = vunpack.c.l.b16 %v199
    %v268 = vunpack.c.l.b16 %v200
    %v269 = vunpack.c.l.b16 %v201
    %v270 = vunpack.c.l.b16 %v202
    %v271 = vunpack.c.l.b16 %v203
    %v272 = vunpack.c.l.b16 %v204
    %v273 = vunpack.c.l.b16 %v205
    %v274 = vunpack.c.l.b16 %v206
    %v275 = vunpack.c.l.b16 %v207
    %v276 = vunpack.c.l.b16 %v208
    %v277 = vunpack.c.l.b16 %v209
    %v278 = vpack.c.b16 %v261, %v260
    %v279 = vpack.c.b16 %v263, %v262
    %v280 = vpack.c.b16 %v265, %v264
    %v281 = vpack.c.b16 %v267, %v266
    %v282 = vpack.c.b16 %v269, %v268
    %v283 = vpack.c.b16 %v271, %v270
    %v284 = vpack.c.b16 %v273, %v272
    %v285 = vpack.c.b16 %v275, %v274
    %v286 = vpack.c.b16 %v277, %v276
    %v328 = vunpack.c.l.b16 %v210
    %v329 = vunpack.c.h.b16 %v210
    %v330 = vunpack.c.l.b16 %v211
    %v331 = vunpack.c.h.b16 %v211
    %v332 = vunpack.c.l.b16 %v212
    %v333 = vunpack.c.h.b16 %v212
    %v334 = vunpack.c.l.b16 %v213
    %v335 = vunpack.c.h.b16 %v213
    %v336 = vunpack.c.l.b16 %v214
    %v337 = vunpack.c.h.b16 %v214
    %v338 = vunpack.c.l.b16 %v215
    %v339 = vunpack.c.h.b16 %v215
    %v340 = vunpack.c.l.b16 %v216
    %v341 = vunpack.c.h.b16 %v216
    %v342 = vunpack.c.l.b16 %v217
    %v343 = vunpack.c.h.b16 %v217
    %v344 = vunpack.c.l.b16 %v218
    %v345 = vunpack.c.h.b16 %v218
    %v346 = vunpack.c.l.b16 %v219
    %v347 = vunpack.c.h.b16 %v219
    %v348 = vunpack.c.l.b16 %v220
    %v349 = vunpack.c.h.b16 %v220
    %v350 = vunpack.c.l.b16 %v221
    %v351 = vunpack.c.h.b16 %v221
    %v352 = vunpack.c.l.b16 %v222
    %v353 = vunpack.c.h.b16 %v222
    %v354 = vunpack.c.l.b16 %v223
    %v355 = vunpack.c.h.b16 %v223
    %v356 = vunpack.c.l.b16 %v224
    %v357 = vunpack.c.h.b16 %v224
    %v358 = vunpack.c.l.b16 %v225
    %v359 = vunpack.c.h.b16 %v225
    %v360 = vunpack.c.l.b16 %v226
    %v361 = vunpack.c.h.b16 %v226
    %v362 = vunpack.c.l.b16 %v227
    %v363 = vunpack.c.h.b16 %v227
    %v364 = vunpack.c.l.b16 %v228
    %v365 = vunpack.c.h.b16 %v228
    %v366 = vunpack.c.l.b16 %v229
    %v367 = vunpack.c.h.b16 %v229
    %v368 = vunpack.c.l.b16 %v230
    %v369 = vunpack.c.h.b16 %v230
    %v370 = vunpack.c.l.b16 %v231
    %v371 = vunpack.c.h.b16 %v231
    %v372 = vunpack.c.l.b16 %v232
    %v373 = vunpack.c.h.b16 %v232
    %v374 = vunpack.c.l.b16 %v233
    %v375 = vunpack.c.h.b16 %v233
    %v376 = vunpack.c.l.b16 %v234
    %v377 = vunpack.c.h.b16 %v234
    %v378 = vunpack.c.l.b16 %v235
    %v379 = vunpack.c.h.b16 %v235
    %v380 = vunpack.c.l.b16 %v236
    %v381 = vunpack.c.h.b16 %v236
    %v382 = vunpack.c.l.b16 %v237
    %v383 = vunpack.c.h.b16 %v237
    %v384 = vunpack.c.l.b16 %v238
    %v385 = vunpack.c.h.b16 %v238
    %v386 = vunpack.c.l.b16 %v239
    %v387 = vunpack.c.h.b16 %v239
    %v388 = vunpack.c.l.b16 %v240
    %v389 = vunpack.c.h.b16 %v240
    %v390 = vunpack.c.l.b16 %v241
    %v391 = vunpack.c.h.b16 %v241
    %v392 = vpack.c.b16 %v332, %v328
    %v393 = vpack.c.b16 %v333, %v329
    %v394 = vpack.c.b16 %v334, %v330
    %v395 = vpack.c.b16 %v335, %v331
    %v396 = vpack.c.b16 %v340, %v336
    %v397 = vpack.c.b16 %v341, %v337
    %v398 = vpack.c.b16 %v342, %v338
    %v399 = vpack.c.b16 %v343, %v339
    %v400 = vpack.c.b16 %v348, %v344
    %v401 = vpack.c.b16 %v349, %v345
    %v402 = vpack.c.b16 %v350, %v346
    %v403 = vpack.c.b16 %v351, %v347
    %v404 = vpack.c.b16 %v356, %v352
    %v405 = vpack.c.b16 %v357, %v353
    %v406 = vpack.c.b16 %v358, %v354
    %v407 = vpack.c.b16 %v359, %v355
    %v408 = vpack.c.b16 %v364, %v360
    %v409 = vpack.c.b16 %v365, %v361
    %v410 = vpack.c.b16 %v366, %v362
    %v411 = vpack.c.b16 %v367, %v363
    %v412 = vpack.c.b16 %v372, %v368
    %v413 = vpack.c.b16 %v373, %v369
    %v414 = vpack.c.b16 %v374, %v370
    %v415 = vpack.c.b16 %v375, %v371
    %v416 = vpack.c.b16 %v380, %v376
    %v417 = vpack.c.b16 %v381, %v377
    %v418 = vpack.c.b16 %v382, %v378
    %v419 = vpack.c.b16 %v383, %v379
    %v420 = vpack.c.b16 %v388, %v384
    %v421 = vpack.c.b16 %v389, %v385
    %v422 = vpack.c.b16 %v390, %v386
    %v423 = vpack.c.b16 %v391, %v387
    %456 = vmatprep.subr.bf16.mxu0 %v393
    %457 = vmatpush1.bf16.msra.mxu0 %v392
    %458 = vmatprep.subr.bf16.mxu0 %v397
    %459 = vmatpush1.bf16.msra.mxu0 %v396
    %460 = vmatprep.subr.bf16.mxu0 %v401
    %461 = vmatpush1.bf16.msra.mxu0 %v400
    %462 = vmatprep.subr.bf16.mxu0 %v405
    %463 = vmatpush1.bf16.msra.mxu0 %v404
    %464 = vmatprep.subr.bf16.mxu0 %v409
    %465 = vmatpush1.bf16.msra.mxu0 %v408
    %466 = vmatprep.subr.bf16.mxu0 %v413
    %467 = vmatpush1.bf16.msra.mxu0 %v412
    %468 = vmatprep.subr.bf16.mxu0 %v417
    %469 = vmatpush1.bf16.msra.mxu0 %v416
    %470 = vmatprep.subr.bf16.mxu0 %v421
    %471 = vmatpush1.bf16.msra.mxu0 %v420
    %472 = vmatprep.subr.bf16.mxu0 0
    %473 = vmatpush1.bf16.msra.mxu0 0
    %474 = vmatprep.subr.bf16.mxu0 0
    %475 = vmatpush1.bf16.msra.mxu0 0
    %476 = vmatprep.subr.bf16.mxu0 0
    %477 = vmatpush1.bf16.msra.mxu0 0
    %478 = vmatprep.subr.bf16.mxu0 0
    %479 = vmatpush1.bf16.msra.mxu0 0
    %480 = vmatprep.subr.bf16.mxu0 0
    %481 = vmatpush1.bf16.msra.mxu0 0
    %482 = vmatprep.subr.bf16.mxu0 0
    %483 = vmatpush1.bf16.msra.mxu0 0
    %484 = vmatprep.subr.bf16.mxu0 0
    %485 = vmatpush1.bf16.msra.mxu0 0
    %486 = vmatprep.subr.bf16.mxu0 0
    %487 = vmatpush1.bf16.msra.mxu0 0
    %488 = vmatprep.mubr.bf16.mxu0 0
    %489 = vmatmul.mubr.bf16.gmra.mrb[0].mxu0 %v278
    %v490 = vpop.f32.mrb[0].mxu0
    %v491 = vadd.f32 0.0, %v490
    %v492 = vpop.f32.mrb[0].mxu0
    %v493 = vadd.f32 0.0, %v492
    %v494 = vpop.f32.mrb[0].mxu0
    %v495 = vadd.f32 0.0, %v494
    %v496 = vpop.f32.mrb[0].mxu0
    %v497 = vadd.f32 0.0, %v496
    %498 = vmatprep.mubr.bf16.mxu0 0
    %499 = vmatmul.mubr.bf16.gmra.mrb[0].mxu0 %v279
    %v500 = vpop.f32.mrb[0].mxu0
    %v501 = vadd.f32 0.0, %v500
    %v502 = vpop.f32.mrb[0].mxu0
    %v503 = vadd.f32 0.0, %v502
    %v504 = vpop.f32.mrb[0].mxu0
    %v505 = vadd.f32 0.0, %v504
    %v506 = vpop.f32.mrb[0].mxu0
    %v507 = vadd.f32 0.0, %v506
    %508 = vmatprep.mubr.bf16.mxu0 0
    %509 = vmatmul.mubr.bf16.gmra.mrb[0].mxu0 %v280
    %v510 = vpop.f32.mrb[0].mxu0
    %v511 = vadd.f32 0.0, %v510
    %v512 = vpop.f32.mrb[0].mxu0
    %v513 = vadd.f32 0.0, %v512
    %v514 = vpop.f32.mrb[0].mxu0
    %v515 = vadd.f32 0.0, %v514
    %v516 = vpop.f32.mrb[0].mxu0
    %v517 = vadd.f32 0.0, %v516
    %518 = vmatprep.mubr.bf16.mxu0 0
    %519 = vmatmul.mubr.bf16.gmra.mrb[0].mxu0 %v281
    %v520 = vpop.f32.mrb[0].mxu0
    %v521 = vadd.f32 0.0, %v520
    %v522 = vpop.f32.mrb[0].mxu0
    %v523 = vadd.f32 0.0, %v522
    %v524 = vpop.f32.mrb[0].mxu0
    %v525 = vadd.f32 0.0, %v524
    %v526 = vpop.f32.mrb[0].mxu0
    %v527 = vadd.f32 0.0, %v526
    %528 = vmatprep.mubr.bf16.mxu0 0
    %529 = vmatmul.mubr.bf16.gmra.mrb[0].mxu0 %v282
    %v530 = vpop.f32.mrb[0].mxu0
    %v531 = vadd.f32 0.0, %v530
    %v532 = vpop.f32.mrb[0].mxu0
    %v533 = vadd.f32 0.0, %v532
    %v534 = vpop.f32.mrb[0].mxu0
    %v535 = vadd.f32 0.0, %v534
    %v536 = vpop.f32.mrb[0].mxu0
    %v537 = vadd.f32 0.0, %v536
    %538 = vmatprep.mubr.bf16.mxu0 0
    %539 = vmatmul.mubr.bf16.gmra.mrb[0].mxu0 %v283
    %v540 = vpop.f32.mrb[0].mxu0
    %v541 = vadd.f32 0.0, %v540
    %v542 = vpop.f32.mrb[0].mxu0
    %v543 = vadd.f32 0.0, %v542
    %v544 = vpop.f32.mrb[0].mxu0
    %v545 = vadd.f32 0.0, %v544
    %v546 = vpop.f32.mrb[0].mxu0
    %v547 = vadd.f32 0.0, %v546
    %548 = vmatprep.mubr.bf16.mxu0 0
    %549 = vmatmul.mubr.bf16.gmra.mrb[0].mxu0 %v284
    %v550 = vpop.f32.mrb[0].mxu0
    %v551 = vadd.f32 0.0, %v550
    %v552 = vpop.f32.mrb[0].mxu0
    %v553 = vadd.f32 0.0, %v552
    %v554 = vpop.f32.mrb[0].mxu0
    %v555 = vadd.f32 0.0, %v554
    %v556 = vpop.f32.mrb[0].mxu0
    %v557 = vadd.f32 0.0, %v556
    %558 = vmatprep.mubr.bf16.mxu0 0
    %559 = vmatmul.mubr.bf16.gmra.mrb[0].mxu0 %v285
    %v560 = vpop.f32.mrb[0].mxu0
    %v561 = vadd.f32 0.0, %v560
    %v562 = vpop.f32.mrb[0].mxu0
    %v563 = vadd.f32 0.0, %v562
    %v564 = vpop.f32.mrb[0].mxu0
    %v565 = vadd.f32 0.0, %v564
    %v566 = vpop.f32.mrb[0].mxu0
    %v567 = vadd.f32 0.0, %v566
    %568 = vmatprep.mubr.bf16.mxu0 0
    %569 = vmatmul.mubr.bf16.gmra.mrb[0].mxu0 %v286
    %v570 = vpop.f32.mrb[0].mxu0
    %v571 = vadd.f32 0.0, %v570
    %v572 = vpop.f32.mrb[0].mxu0
    %v573 = vadd.f32 0.0, %v572
    %v574 = vpop.f32.mrb[0].mxu0
    %v575 = vadd.f32 0.0, %v574
    %v576 = vpop.f32.mrb[0].mxu0
    %v577 = vadd.f32 0.0, %v576
    %578 = vdwg.mxu0
    %579 = vmatprep.subr.bf16.mxu0 %v395
    %580 = vmatpush1.bf16.msra.mxu0 %v394
    %581 = vmatprep.subr.bf16.mxu0 %v399
    %582 = vmatpush1.bf16.msra.mxu0 %v398
    %583 = vmatprep.subr.bf16.mxu0 %v403
    %584 = vmatpush1.bf16.msra.mxu0 %v402
    %585 = vmatprep.subr.bf16.mxu0 %v407
    %586 = vmatpush1.bf16.msra.mxu0 %v406
    %587 = vmatprep.subr.bf16.mxu0 %v411
    %588 = vmatpush1.bf16.msra.mxu0 %v410
    %589 = vmatprep.subr.bf16.mxu0 %v415
    %590 = vmatpush1.bf16.msra.mxu0 %v414
    %591 = vmatprep.subr.bf16.mxu0 %v419
    %592 = vmatpush1.bf16.msra.mxu0 %v418
    %593 = vmatprep.subr.bf16.mxu0 %v423
    %594 = vmatpush1.bf16.msra.mxu0 %v422
    %595 = vmatprep.subr.bf16.mxu0 0
    %596 = vmatpush1.bf16.msra.mxu0 0
    %597 = vmatprep.subr.bf16.mxu0 0
    %598 = vmatpush1.bf16.msra.mxu0 0
    %599 = vmatprep.subr.bf16.mxu0 0
    %600 = vmatpush1.bf16.msra.mxu0 0
    %601 = vmatprep.subr.bf16.mxu0 0
    %602 = vmatpush1.bf16.msra.mxu0 0
    %603 = vmatprep.subr.bf16.mxu0 0
    %604 = vmatpush1.bf16.msra.mxu0 0
    %605 = vmatprep.subr.bf16.mxu0 0
    %606 = vmatpush1.bf16.msra.mxu0 0
    %607 = vmatprep.subr.bf16.mxu0 0
    %608 = vmatpush1.bf16.msra.mxu0 0
    %609 = vmatprep.subr.bf16.mxu0 0
    %610 = vmatpush1.bf16.msra.mxu0 0
    %611 = vmatprep.mubr.bf16.mxu0 0
    %612 = vmatmul.mubr.bf16.gmra.mrb[0].mxu0 %v278
    %v613 = vpop.f32.mrb[0].mxu0
    %v614 = vadd.f32 0.0, %v613
    %v615 = vpop.f32.mrb[0].mxu0
    %v616 = vadd.f32 0.0, %v615
    %v617 = vpop.f32.mrb[0].mxu0
    %v618 = vadd.f32 0.0, %v617
    %v619 = vpop.f32.mrb[0].mxu0
    %v620 = vadd.f32 0.0, %v619
    %621 = vmatprep.mubr.bf16.mxu0 0
    %622 = vmatmul.mubr.bf16.gmra.mrb[0].mxu0 %v279
    %v623 = vpop.f32.mrb[0].mxu0
    %v624 = vadd.f32 0.0, %v623
    %v625 = vpop.f32.mrb[0].mxu0
    %v626 = vadd.f32 0.0, %v625
    %v627 = vpop.f32.mrb[0].mxu0
    %v628 = vadd.f32 0.0, %v627
    %v629 = vpop.f32.mrb[0].mxu0
    %v630 = vadd.f32 0.0, %v629
    %631 = vmatprep.mubr.bf16.mxu0 0
    %632 = vmatmul.mubr.bf16.gmra.mrb[0].mxu0 %v280
    %v633 = vpop.f32.mrb[0].mxu0
    %v634 = vadd.f32 0.0, %v633
    %v635 = vpop.f32.mrb[0].mxu0
    %v636 = vadd.f32 0.0, %v635
    %v637 = vpop.f32.mrb[0].mxu0
    %v638 = vadd.f32 0.0, %v637
    %v639 = vpop.f32.mrb[0].mxu0
    %v640 = vadd.f32 0.0, %v639
    %641 = vmatprep.mubr.bf16.mxu0 0
    %642 = vmatmul.mubr.bf16.gmra.mrb[0].mxu0 %v281
    %v643 = vpop.f32.mrb[0].mxu0
    %v644 = vadd.f32 0.0, %v643
    %v645 = vpop.f32.mrb[0].mxu0
    %v646 = vadd.f32 0.0, %v645
    %v647 = vpop.f32.mrb[0].mxu0
    %v648 = vadd.f32 0.0, %v647
    %v649 = vpop.f32.mrb[0].mxu0
    %v650 = vadd.f32 0.0, %v649
    %651 = vmatprep.mubr.bf16.mxu0 0
    %652 = vmatmul.mubr.bf16.gmra.mrb[0].mxu0 %v282
    %v653 = vpop.f32.mrb[0].mxu0
    %v654 = vadd.f32 0.0, %v653
    %v655 = vpop.f32.mrb[0].mxu0
    %v656 = vadd.f32 0.0, %v655
    %v657 = vpop.f32.mrb[0].mxu0
    %v658 = vadd.f32 0.0, %v657
    %v659 = vpop.f32.mrb[0].mxu0
    %v660 = vadd.f32 0.0, %v659
    %661 = vmatprep.mubr.bf16.mxu0 0
    %662 = vmatmul.mubr.bf16.gmra.mrb[0].mxu0 %v283
    %v663 = vpop.f32.mrb[0].mxu0
    %v664 = vadd.f32 0.0, %v663
    %v665 = vpop.f32.mrb[0].mxu0
    %v666 = vadd.f32 0.0, %v665
    %v667 = vpop.f32.mrb[0].mxu0
    %v668 = vadd.f32 0.0, %v667
    %v669 = vpop.f32.mrb[0].mxu0
    %v670 = vadd.f32 0.0, %v669
    %671 = vmatprep.mubr.bf16.mxu0 0
    %672 = vmatmul.mubr.bf16.gmra.mrb[0].mxu0 %v284
    %v673 = vpop.f32.mrb[0].mxu0
    %v674 = vadd.f32 0.0, %v673
    %v675 = vpop.f32.mrb[0].mxu0
    %v676 = vadd.f32 0.0, %v675
    %v677 = vpop.f32.mrb[0].mxu0
    %v678 = vadd.f32 0.0, %v677
    %v679 = vpop.f32.mrb[0].mxu0
    %v680 = vadd.f32 0.0, %v679
    %681 = vmatprep.mubr.bf16.mxu0 0
    %682 = vmatmul.mubr.bf16.gmra.mrb[0].mxu0 %v285
    %v683 = vpop.f32.mrb[0].mxu0
    %v684 = vadd.f32 0.0, %v683
    %v685 = vpop.f32.mrb[0].mxu0
    %v686 = vadd.f32 0.0, %v685
    %v687 = vpop.f32.mrb[0].mxu0
    %v688 = vadd.f32 0.0, %v687
    %v689 = vpop.f32.mrb[0].mxu0
    %v690 = vadd.f32 0.0, %v689
    %691 = vmatprep.mubr.bf16.mxu0 0
    %692 = vmatmul.mubr.bf16.gmra.mrb[0].mxu0 %v286
    %v693 = vpop.f32.mrb[0].mxu0
    %v694 = vadd.f32 0.0, %v693
    %v695 = vpop.f32.mrb[0].mxu0
    %v696 = vadd.f32 0.0, %v695
    %v697 = vpop.f32.mrb[0].mxu0
    %v698 = vadd.f32 0.0, %v697
    %v699 = vpop.f32.mrb[0].mxu0
    %v700 = vadd.f32 0.0, %v699
    %701 = vdwg.mxu0
    %v702 = vadd.f32 %v120, %v491
    %v703 = vadd.f32 %v121, %v493
    %v704 = vadd.f32 %v122, %v614
    %v705 = vadd.f32 %v123, %v616
    %v706 = vadd.f32 %v124, %v495
    %v707 = vadd.f32 %v125, %v497
    %v708 = vadd.f32 %v126, %v618
    %v709 = vadd.f32 %v127, %v620
    %v710 = vadd.f32 %v128, %v501
    %v711 = vadd.f32 %v129, %v503
    %v712 = vadd.f32 %v130, %v624
    %v713 = vadd.f32 %v131, %v626
    %v714 = vadd.f32 %v132, %v505
    %v715 = vadd.f32 %v133, %v507
    %v716 = vadd.f32 %v134, %v628
    %v717 = vadd.f32 %v135, %v630
    %v718 = vadd.f32 %v136, %v511
    %v719 = vadd.f32 %v137, %v513
    %v720 = vadd.f32 %v138, %v634
    %v721 = vadd.f32 %v139, %v636
    %v722 = vadd.f32 %v140, %v515
    %v723 = vadd.f32 %v141, %v517
    %v724 = vadd.f32 %v142, %v638
    %v725 = vadd.f32 %v143, %v640
    %v726 = vadd.f32 %v144, %v521
    %v727 = vadd.f32 %v145, %v523
    %v728 = vadd.f32 %v146, %v644
    %v729 = vadd.f32 %v147, %v646
    %v730 = vadd.f32 %v148, %v525
    %v731 = vadd.f32 %v149, %v527
    %v732 = vadd.f32 %v150, %v648
    %v733 = vadd.f32 %v151, %v650
    %v734 = vadd.f32 %v152, %v531
    %v735 = vadd.f32 %v153, %v533
    %v736 = vadd.f32 %v154, %v654
    %v737 = vadd.f32 %v155, %v656
    %v738 = vadd.f32 %v156, %v535
    %v739 = vadd.f32 %v157, %v537
    %v740 = vadd.f32 %v158, %v658
    %v741 = vadd.f32 %v159, %v660
    %v742 = vadd.f32 %v160, %v541
    %v743 = vadd.f32 %v161, %v543
    %v744 = vadd.f32 %v162, %v664
    %v745 = vadd.f32 %v163, %v666
    %v746 = vadd.f32 %v164, %v545
    %v747 = vadd.f32 %v165, %v547
    %v748 = vadd.f32 %v166, %v668
    %v749 = vadd.f32 %v167, %v670
    %v750 = vadd.f32 %v168, %v551
    %v751 = vadd.f32 %v169, %v553
    %v752 = vadd.f32 %v170, %v674
    %v753 = vadd.f32 %v171, %v676
    %v754 = vadd.f32 %v172, %v555
    %v755 = vadd.f32 %v173, %v557
    %v756 = vadd.f32 %v174, %v678
    %v757 = vadd.f32 %v175, %v680
    %v758 = vadd.f32 %v176, %v561
    %v759 = vadd.f32 %v177, %v563
    %v760 = vadd.f32 %v178, %v684
    %v761 = vadd.f32 %v179, %v686
    %v762 = vadd.f32 %v180, %v565
    %v763 = vadd.f32 %v181, %v567
    %v764 = vadd.f32 %v182, %v688
    %v765 = vadd.f32 %v183, %v690
    %v766 = vadd.f32 %v184, %v571
    %v767 = vadd.f32 %v185, %v573
    %v768 = vadd.f32 %v186, %v694
    %v769 = vadd.f32 %v187, %v696
    %v770 = vadd.f32 %v188, %v575
    %v771 = vadd.f32 %v189, %v577
    %v772 = vadd.f32 %v190, %v698
    %v773 = vadd.f32 %v191, %v700
    %774 = vst [vmem:[#allocation2] sm:$0xff] %v702
    %775 = vst [vmem:[#allocation2 + $0x8] sm:$0xff] %v703
    %776 = vst [vmem:[#allocation2 + $0x10] sm:$0xff] %v704
    %777 = vst [vmem:[#allocation2 + $0x18] sm:$0xff] %v705
    %778 = vst [vmem:[#allocation2 + $0x20] sm:$0xff] %v706
    %779 = vst [vmem:[#allocation2 + $0x28] sm:$0xff] %v707
    %780 = vst [vmem:[#allocation2 + $0x30] sm:$0xff] %v708
    %781 = vst [vmem:[#allocation2 + $0x38] sm:$0xff] %v709
    %782 = vst [vmem:[#allocation2 + $0x40] sm:$0xff] %v710
    %783 = vst [vmem:[#allocation2 + $0x48] sm:$0xff] %v711
    %784 = vst [vmem:[#allocation2 + $0x50] sm:$0xff] %v712
    %785 = vst [vmem:[#allocation2 + $0x58] sm:$0xff] %v713
    %786 = vst [vmem:[#allocation2 + $0x60] sm:$0xff] %v714
    %787 = vst [vmem:[#allocation2 + $0x68] sm:$0xff] %v715
    %788 = vst [vmem:[#allocation2 + $0x70] sm:$0xff] %v716
    %789 = vst [vmem:[#allocation2 + $0x78] sm:$0xff] %v717
    %790 = vst [vmem:[#allocation2 + $0x80] sm:$0xff] %v718
    %791 = vst [vmem:[#allocation2 + $0x88] sm:$0xff] %v719
    %792 = vst [vmem:[#allocation2 + $0x90] sm:$0xff] %v720
    %793 = vst [vmem:[#allocation2 + $0x98] sm:$0xff] %v721
    %794 = vst [vmem:[#allocation2 + $0xa0] sm:$0xff] %v722
    %795 = vst [vmem:[#allocation2 + $0xa8] sm:$0xff] %v723
    %796 = vst [vmem:[#allocation2 + $0xb0] sm:$0xff] %v724
    %797 = vst [vmem:[#allocation2 + $0xb8] sm:$0xff] %v725
    %798 = vst [vmem:[#allocation2 + $0xc0] sm:$0xff] %v726
    %799 = vst [vmem:[#allocation2 + $0xc8] sm:$0xff] %v727
    %800 = vst [vmem:[#allocation2 + $0xd0] sm:$0xff] %v728
    %801 = vst [vmem:[#allocation2 + $0xd8] sm:$0xff] %v729
    %802 = vst [vmem:[#allocation2 + $0xe0] sm:$0xff] %v730
    %803 = vst [vmem:[#allocation2 + $0xe8] sm:$0xff] %v731
    %804 = vst [vmem:[#allocation2 + $0xf0] sm:$0xff] %v732
    %805 = vst [vmem:[#allocation2 + $0xf8] sm:$0xff] %v733
    %806 = vst [vmem:[#allocation2 + $0x100] sm:$0xff] %v734
    %807 = vst [vmem:[#allocation2 + $0x108] sm:$0xff] %v735
    %808 = vst [vmem:[#allocation2 + $0x110] sm:$0xff] %v736
    %809 = vst [vmem:[#allocation2 + $0x118] sm:$0xff] %v737
    %810 = vst [vmem:[#allocation2 + $0x120] sm:$0xff] %v738
    %811 = vst [vmem:[#allocation2 + $0x128] sm:$0xff] %v739
    %812 = vst [vmem:[#allocation2 + $0x130] sm:$0xff] %v740
    %813 = vst [vmem:[#allocation2 + $0x138] sm:$0xff] %v741
    %814 = vst [vmem:[#allocation2 + $0x140] sm:$0xff] %v742
    %815 = vst [vmem:[#allocation2 + $0x148] sm:$0xff] %v743
    %816 = vst [vmem:[#allocation2 + $0x150] sm:$0xff] %v744
    %817 = vst [vmem:[#allocation2 + $0x158] sm:$0xff] %v745
    %818 = vst [vmem:[#allocation2 + $0x160] sm:$0xff] %v746
    %819 = vst [vmem:[#allocation2 + $0x168] sm:$0xff] %v747
    %820 = vst [vmem:[#allocation2 + $0x170] sm:$0xff] %v748
    %821 = vst [vmem:[#allocation2 + $0x178] sm:$0xff] %v749
    %822 = vst [vmem:[#allocation2 + $0x180] sm:$0xff] %v750
    %823 = vst [vmem:[#allocation2 + $0x188] sm:$0xff] %v751
    %824 = vst [vmem:[#allocation2 + $0x190] sm:$0xff] %v752
    %825 = vst [vmem:[#allocation2 + $0x198] sm:$0xff] %v753
    %826 = vst [vmem:[#allocation2 + $0x1a0] sm:$0xff] %v754
    %827 = vst [vmem:[#allocation2 + $0x1a8] sm:$0xff] %v755
    %828 = vst [vmem:[#allocation2 + $0x1b0] sm:$0xff] %v756
    %829 = vst [vmem:[#allocation2 + $0x1b8] sm:$0xff] %v757
    %830 = vst [vmem:[#allocation2 + $0x1c0] sm:$0xff] %v758
    %831 = vst [vmem:[#allocation2 + $0x1c8] sm:$0xff] %v759
    %832 = vst [vmem:[#allocation2 + $0x1d0] sm:$0xff] %v760
    %833 = vst [vmem:[#allocation2 + $0x1d8] sm:$0xff] %v761
    %834 = vst [vmem:[#allocation2 + $0x1e0] sm:$0xff] %v762
    %835 = vst [vmem:[#allocation2 + $0x1e8] sm:$0xff] %v763
    %836 = vst [vmem:[#allocation2 + $0x1f0] sm:$0xff] %v764
    %837 = vst [vmem:[#allocation2 + $0x1f8] sm:$0xff] %v765
    %838 = vst [vmem:[#allocation2 + $0x200] sm:$0xff] %v766
    %839 = vst [vmem:[#allocation2 + $0x208] sm:$0xff] %v767
    %840 = vst [vmem:[#allocation2 + $0x210] sm:$0xff] %v768
    %841 = vst [vmem:[#allocation2 + $0x218] sm:$0xff] %v769
    %842 = vst [vmem:[#allocation2 + $0x220] sm:$0xff] %v770
    %843 = vst [vmem:[#allocation2 + $0x228] sm:$0xff] %v771
    %844 = vst [vmem:[#allocation2 + $0x230] sm:$0xff] %v772
    %845 = vst [vmem:[#allocation2 + $0x238] sm:$0xff] %v773
    // Predicated region
    $region26: #{tpu_custom_call.1} parent=1 // pred_check
      %p846 = pneg %p44
    $region27: #{tpu_custom_call.1} parent=1 // pred_check_branch
      %848 = sbr.rel (%p846) target = $region29
    $region28: #{tpu_custom_call.1} parent=1 // pred_region
      %v849 = vld [vmem:[#allocation2] sm:$0xff]
      %v850 = vld [vmem:[#allocation2 + $0x8] sm:$0xff]
      %v851 = vld [vmem:[#allocation2 + $0x10] sm:$0xff]
      %v852 = vld [vmem:[#allocation2 + $0x18] sm:$0xff]
      %v853 = vld [vmem:[#allocation2 + $0x20] sm:$0xff]
      %v854 = vld [vmem:[#allocation2 + $0x28] sm:$0xff]
      %v855 = vld [vmem:[#allocation2 + $0x30] sm:$0xff]
      %v856 = vld [vmem:[#allocation2 + $0x38] sm:$0xff]
      %v857 = vld [vmem:[#allocation2 + $0x40] sm:$0xff]
      %v858 = vld [vmem:[#allocation2 + $0x48] sm:$0xff]
      %v859 = vld [vmem:[#allocation2 + $0x50] sm:$0xff]
      %v860 = vld [vmem:[#allocation2 + $0x58] sm:$0xff]
      %v861 = vld [vmem:[#allocation2 + $0x60] sm:$0xff]
      %v862 = vld [vmem:[#allocation2 + $0x68] sm:$0xff]
      %v863 = vld [vmem:[#allocation2 + $0x70] sm:$0xff]
      %v864 = vld [vmem:[#allocation2 + $0x78] sm:$0xff]
      %v865 = vld [vmem:[#allocation2 + $0x80] sm:$0xff]
      %v866 = vld [vmem:[#allocation2 + $0x88] sm:$0xff]
      %v867 = vld [vmem:[#allocation2 + $0x90] sm:$0xff]
      %v868 = vld [vmem:[#allocation2 + $0x98] sm:$0xff]
      %v869 = vld [vmem:[#allocation2 + $0xa0] sm:$0xff]
      %v870 = vld [vmem:[#allocation2 + $0xa8] sm:$0xff]
      %v871 = vld [vmem:[#allocation2 + $0xb0] sm:$0xff]
      %v872 = vld [vmem:[#allocation2 + $0xb8] sm:$0xff]
      %v873 = vld [vmem:[#allocation2 + $0xc0] sm:$0xff]
      %v874 = vld [vmem:[#allocation2 + $0xc8] sm:$0xff]
      %v875 = vld [vmem:[#allocation2 + $0xd0] sm:$0xff]
      %v876 = vld [vmem:[#allocation2 + $0xd8] sm:$0xff]
      %v877 = vld [vmem:[#allocation2 + $0xe0] sm:$0xff]
      %v878 = vld [vmem:[#allocation2 + $0xe8] sm:$0xff]
      %v879 = vld [vmem:[#allocation2 + $0xf0] sm:$0xff]
      %v880 = vld [vmem:[#allocation2 + $0xf8] sm:$0xff]
      %v881 = vld [vmem:[#allocation2 + $0x100] sm:$0xff]
      %v882 = vld [vmem:[#allocation2 + $0x108] sm:$0xff]
      %v883 = vld [vmem:[#allocation2 + $0x110] sm:$0xff]
      %v884 = vld [vmem:[#allocation2 + $0x118] sm:$0xff]
      %v885 = vld [vmem:[#allocation2 + $0x120] sm:$0xff]
      %v886 = vld [vmem:[#allocation2 + $0x128] sm:$0xff]
      %v887 = vld [vmem:[#allocation2 + $0x130] sm:$0xff]
      %v888 = vld [vmem:[#allocation2 + $0x138] sm:$0xff]
      %v889 = vld [vmem:[#allocation2 + $0x140] sm:$0xff]
      %v890 = vld [vmem:[#allocation2 + $0x148] sm:$0xff]
      %v891 = vld [vmem:[#allocation2 + $0x150] sm:$0xff]
      %v892 = vld [vmem:[#allocation2 + $0x158] sm:$0xff]
      %v893 = vld [vmem:[#allocation2 + $0x160] sm:$0xff]
      %v894 = vld [vmem:[#allocation2 + $0x168] sm:$0xff]
      %v895 = vld [vmem:[#allocation2 + $0x170] sm:$0xff]
      %v896 = vld [vmem:[#allocation2 + $0x178] sm:$0xff]
      %v897 = vld [vmem:[#allocation2 + $0x180] sm:$0xff]
      %v898 = vld [vmem:[#allocation2 + $0x188] sm:$0xff]
      %v899 = vld [vmem:[#allocation2 + $0x190] sm:$0xff]
      %v900 = vld [vmem:[#allocation2 + $0x198] sm:$0xff]
      %v901 = vld [vmem:[#allocation2 + $0x1a0] sm:$0xff]
      %v902 = vld [vmem:[#allocation2 + $0x1a8] sm:$0xff]
      %v903 = vld [vmem:[#allocation2 + $0x1b0] sm:$0xff]
      %v904 = vld [vmem:[#allocation2 + $0x1b8] sm:$0xff]
      %v905 = vld [vmem:[#allocation2 + $0x1c0] sm:$0xff]
      %v906 = vld [vmem:[#allocation2 + $0x1c8] sm:$0xff]
      %v907 = vld [vmem:[#allocation2 + $0x1d0] sm:$0xff]
      %v908 = vld [vmem:[#allocation2 + $0x1d8] sm:$0xff]
      %v909 = vld [vmem:[#allocation2 + $0x1e0] sm:$0xff]
      %v910 = vld [vmem:[#allocation2 + $0x1e8] sm:$0xff]
      %v911 = vld [vmem:[#allocation2 + $0x1f0] sm:$0xff]
      %v912 = vld [vmem:[#allocation2 + $0x1f8] sm:$0xff]
      %v913 = vld [vmem:[#allocation2 + $0x200] sm:$0xff]
      %v914 = vld [vmem:[#allocation2 + $0x208] sm:$0xff]
      %v915 = vld [vmem:[#allocation2 + $0x210] sm:$0xff]
      %v916 = vld [vmem:[#allocation2 + $0x218] sm:$0xff]
      %v917 = vld [vmem:[#allocation2 + $0x220] sm:$0xff]
      %v918 = vld [vmem:[#allocation2 + $0x228] sm:$0xff]
      %v919 = vld [vmem:[#allocation2 + $0x230] sm:$0xff]
      %v920 = vld [vmem:[#allocation2 + $0x238] sm:$0xff]
      %v921 = vld [vmem:[%s2] sm:$0xf]
      %v923 = vlaneseq
      %v924 = vshrl.u32 %v923, 7
      %v925 = vsub.s32 0, %v924
      %v926 = vrot.slane %v921, %v925
      %v927 = vlaneseq
      %v928 = vshrl.u32 %v927, 7
      %v929 = vsub.s32 1, %v928
      %v930 = vrot.slane %v921, %v929
      %v931 = vlaneseq
      %v932 = vshrl.u32 %v931, 7
      %v933 = vsub.s32 2, %v932
      %v934 = vrot.slane %v921, %v933
      %v935 = vlaneseq
      %v936 = vshrl.u32 %v935, 7
      %v937 = vsub.s32 3, %v936
      %v938 = vrot.slane %v921, %v937
      %v943 = vadd.f32 %v849, %v926
      %v944 = vadd.f32 %v850, %v930
      %v945 = vadd.f32 %v851, %v934
      %v946 = vadd.f32 %v852, %v938
      %v947 = vadd.f32 %v853, %v926
      %v948 = vadd.f32 %v854, %v930
      %v949 = vadd.f32 %v855, %v934
      %v950 = vadd.f32 %v856, %v938
      %v951 = vadd.f32 %v857, %v926
      %v952 = vadd.f32 %v858, %v930
      %v953 = vadd.f32 %v859, %v934
      %v954 = vadd.f32 %v860, %v938
      %v955 = vadd.f32 %v861, %v926
      %v956 = vadd.f32 %v862, %v930
      %v957 = vadd.f32 %v863, %v934
      %v958 = vadd.f32 %v864, %v938
      %v959 = vadd.f32 %v865, %v926
      %v960 = vadd.f32 %v866, %v930
      %v961 = vadd.f32 %v867, %v934
      %v962 = vadd.f32 %v868, %v938
      %v963 = vadd.f32 %v869, %v926
      %v964 = vadd.f32 %v870, %v930
      %v965 = vadd.f32 %v871, %v934
      %v966 = vadd.f32 %v872, %v938
      %v967 = vadd.f32 %v873, %v926
      %v968 = vadd.f32 %v874, %v930
      %v969 = vadd.f32 %v875, %v934
      %v970 = vadd.f32 %v876, %v938
      %v971 = vadd.f32 %v877, %v926
      %v972 = vadd.f32 %v878, %v930
      %v973 = vadd.f32 %v879, %v934
      %v974 = vadd.f32 %v880, %v938
      %v975 = vadd.f32 %v881, %v926
      %v976 = vadd.f32 %v882, %v930
      %v977 = vadd.f32 %v883, %v934
      %v978 = vadd.f32 %v884, %v938
      %v979 = vadd.f32 %v885, %v926
      %v980 = vadd.f32 %v886, %v930
      %v981 = vadd.f32 %v887, %v934
      %v982 = vadd.f32 %v888, %v938
      %v983 = vadd.f32 %v889, %v926
      %v984 = vadd.f32 %v890, %v930
      %v985 = vadd.f32 %v891, %v934
      %v986 = vadd.f32 %v892, %v938
      %v987 = vadd.f32 %v893, %v926
      %v988 = vadd.f32 %v894, %v930
      %v989 = vadd.f32 %v895, %v934
      %v990 = vadd.f32 %v896, %v938
      %v991 = vadd.f32 %v897, %v926
      %v992 = vadd.f32 %v898, %v930
      %v993 = vadd.f32 %v899, %v934
      %v994 = vadd.f32 %v900, %v938
      %v995 = vadd.f32 %v901, %v926
      %v996 = vadd.f32 %v902, %v930
      %v997 = vadd.f32 %v903, %v934
      %v998 = vadd.f32 %v904, %v938
      %v999 = vadd.f32 %v905, %v926
      %v1000 = vadd.f32 %v906, %v930
      %v1001 = vadd.f32 %v907, %v934
      %v1002 = vadd.f32 %v908, %v938
      %v1003 = vadd.f32 %v909, %v926
      %v1004 = vadd.f32 %v910, %v930
      %v1005 = vadd.f32 %v911, %v934
      %v1006 = vadd.f32 %v912, %v938
      %v1007 = vadd.f32 %v913, %v926
      %v1008 = vadd.f32 %v914, %v930
      %v1009 = vadd.f32 %v915, %v934
      %v1010 = vadd.f32 %v916, %v938
      %v1011 = vadd.f32 %v917, %v926
      %v1012 = vadd.f32 %v918, %v930
      %v1013 = vadd.f32 %v919, %v934
      %v1014 = vadd.f32 %v920, %v938
      %v1015 = vpack.c.bf16 %v947, %v943
      %v1016 = vpack.c.bf16 %v948, %v944
      %v1017 = vpack.c.bf16 %v949, %v945
      %v1018 = vpack.c.bf16 %v950, %v946
      %v1019 = vpack.c.bf16 %v955, %v951
      %v1020 = vpack.c.bf16 %v956, %v952
      %v1021 = vpack.c.bf16 %v957, %v953
      %v1022 = vpack.c.bf16 %v958, %v954
      %v1023 = vpack.c.bf16 %v963, %v959
      %v1024 = vpack.c.bf16 %v964, %v960
      %v1025 = vpack.c.bf16 %v965, %v961
      %v1026 = vpack.c.bf16 %v966, %v962
      %v1027 = vpack.c.bf16 %v971, %v967
      %v1028 = vpack.c.bf16 %v972, %v968
      %v1029 = vpack.c.bf16 %v973, %v969
      %v1030 = vpack.c.bf16 %v974, %v970
      %v1031 = vpack.c.bf16 %v979, %v975
      %v1032 = vpack.c.bf16 %v980, %v976
      %v1033 = vpack.c.bf16 %v981, %v977
      %v1034 = vpack.c.bf16 %v982, %v978
      %v1035 = vpack.c.bf16 %v987, %v983
      %v1036 = vpack.c.bf16 %v988, %v984
      %v1037 = vpack.c.bf16 %v989, %v985
      %v1038 = vpack.c.bf16 %v990, %v986
      %v1039 = vpack.c.bf16 %v995, %v991
      %v1040 = vpack.c.bf16 %v996, %v992
      %v1041 = vpack.c.bf16 %v997, %v993
      %v1042 = vpack.c.bf16 %v998, %v994
      %v1043 = vpack.c.bf16 %v1003, %v999
      %v1044 = vpack.c.bf16 %v1004, %v1000
      %v1045 = vpack.c.bf16 %v1005, %v1001
      %v1046 = vpack.c.bf16 %v1006, %v1002
      %v1047 = vpack.c.bf16 %v1011, %v1007
      %v1048 = vpack.c.bf16 %v1012, %v1008
      %v1049 = vpack.c.bf16 %v1013, %v1009
      %v1050 = vpack.c.bf16 %v1014, %v1010
      %v1087 = vunpack.c.l.b16 %v1015
      %v1088 = vunpack.c.l.b16 %v1016
      %v1089 = vunpack.c.l.b16 %v1017
      %v1090 = vunpack.c.l.b16 %v1018
      %v1091 = vunpack.c.h.b16 %v1015
      %v1092 = vunpack.c.h.b16 %v1016
      %v1093 = vunpack.c.h.b16 %v1017
      %v1094 = vunpack.c.h.b16 %v1018
      %v1095 = vunpack.c.l.b16 %v1019
      %v1096 = vunpack.c.l.b16 %v1020
      %v1097 = vunpack.c.l.b16 %v1021
      %v1098 = vunpack.c.l.b16 %v1022
      %v1099 = vunpack.c.h.b16 %v1019
      %v1100 = vunpack.c.h.b16 %v1020
      %v1101 = vunpack.c.h.b16 %v1021
      %v1102 = vunpack.c.h.b16 %v1022
      %v1103 = vunpack.c.l.b16 %v1023
      %v1104 = vunpack.c.l.b16 %v1024
      %v1105 = vunpack.c.l.b16 %v1025
      %v1106 = vunpack.c.l.b16 %v1026
      %v1107 = vunpack.c.h.b16 %v1023
      %v1108 = vunpack.c.h.b16 %v1024
      %v1109 = vunpack.c.h.b16 %v1025
      %v1110 = vunpack.c.h.b16 %v1026
      %v1111 = vunpack.c.l.b16 %v1027
      %v1112 = vunpack.c.l.b16 %v1028
      %v1113 = vunpack.c.l.b16 %v1029
      %v1114 = vunpack.c.l.b16 %v1030
      %v1115 = vunpack.c.h.b16 %v1027
      %v1116 = vunpack.c.h.b16 %v1028
      %v1117 = vunpack.c.h.b16 %v1029
      %v1118 = vunpack.c.h.b16 %v1030
      %v1119 = vunpack.c.l.b16 %v1031
      %v1120 = vunpack.c.l.b16 %v1032
      %v1121 = vunpack.c.l.b16 %v1033
      %v1122 = vunpack.c.l.b16 %v1034
      %v1123 = vunpack.c.h.b16 %v1031
      %v1124 = vunpack.c.h.b16 %v1032
      %v1125 = vunpack.c.h.b16 %v1033
      %v1126 = vunpack.c.h.b16 %v1034
      %v1127 = vunpack.c.l.b16 %v1035
      %v1128 = vunpack.c.l.b16 %v1036
      %v1129 = vunpack.c.l.b16 %v1037
      %v1130 = vunpack.c.l.b16 %v1038
      %v1131 = vunpack.c.h.b16 %v1035
      %v1132 = vunpack.c.h.b16 %v1036
      %v1133 = vunpack.c.h.b16 %v1037
      %v1134 = vunpack.c.h.b16 %v1038
      %v1135 = vunpack.c.l.b16 %v1039
      %v1136 = vunpack.c.l.b16 %v1040
      %v1137 = vunpack.c.l.b16 %v1041
      %v1138 = vunpack.c.l.b16 %v1042
      %v1139 = vunpack.c.h.b16 %v1039
      %v1140 = vunpack.c.h.b16 %v1040
      %v1141 = vunpack.c.h.b16 %v1041
      %v1142 = vunpack.c.h.b16 %v1042
      %v1143 = vunpack.c.l.b16 %v1043
      %v1144 = vunpack.c.l.b16 %v1044
      %v1145 = vunpack.c.l.b16 %v1045
      %v1146 = vunpack.c.l.b16 %v1046
      %v1147 = vunpack.c.h.b16 %v1043
      %v1148 = vunpack.c.h.b16 %v1044
      %v1149 = vunpack.c.h.b16 %v1045
      %v1150 = vunpack.c.h.b16 %v1046
      %v1151 = vunpack.c.l.b16 %v1047
      %v1152 = vunpack.c.l.b16 %v1048
      %v1153 = vunpack.c.l.b16 %v1049
      %v1154 = vunpack.c.l.b16 %v1050
      %v1155 = vunpack.c.h.b16 %v1047
      %v1156 = vunpack.c.h.b16 %v1048
      %v1157 = vunpack.c.h.b16 %v1049
      %v1158 = vunpack.c.h.b16 %v1050
      %v1159 = vpack.c.b16 %v1088, %v1087
      %v1160 = vpack.c.b16 %v1090, %v1089
      %v1161 = vpack.c.b16 %v1092, %v1091
      %v1162 = vpack.c.b16 %v1094, %v1093
      %v1163 = vpack.c.b16 %v1096, %v1095
      %v1164 = vpack.c.b16 %v1098, %v1097
      %v1165 = vpack.c.b16 %v1100, %v1099
      %v1166 = vpack.c.b16 %v1102, %v1101
      %v1167 = vpack.c.b16 %v1104, %v1103
      %v1168 = vpack.c.b16 %v1106, %v1105
      %v1169 = vpack.c.b16 %v1108, %v1107
      %v1170 = vpack.c.b16 %v1110, %v1109
      %v1171 = vpack.c.b16 %v1112, %v1111
      %v1172 = vpack.c.b16 %v1114, %v1113
      %v1173 = vpack.c.b16 %v1116, %v1115
      %v1174 = vpack.c.b16 %v1118, %v1117
      %v1175 = vpack.c.b16 %v1120, %v1119
      %v1176 = vpack.c.b16 %v1122, %v1121
      %v1177 = vpack.c.b16 %v1124, %v1123
      %v1178 = vpack.c.b16 %v1126, %v1125
      %v1179 = vpack.c.b16 %v1128, %v1127
      %v1180 = vpack.c.b16 %v1130, %v1129
      %v1181 = vpack.c.b16 %v1132, %v1131
      %v1182 = vpack.c.b16 %v1134, %v1133
      %v1183 = vpack.c.b16 %v1136, %v1135
      %v1184 = vpack.c.b16 %v1138, %v1137
      %v1185 = vpack.c.b16 %v1140, %v1139
      %v1186 = vpack.c.b16 %v1142, %v1141
      %v1187 = vpack.c.b16 %v1144, %v1143
      %v1188 = vpack.c.b16 %v1146, %v1145
      %v1189 = vpack.c.b16 %v1148, %v1147
      %v1190 = vpack.c.b16 %v1150, %v1149
      %v1191 = vpack.c.b16 %v1152, %v1151
      %v1192 = vpack.c.b16 %v1154, %v1153
      %v1193 = vpack.c.b16 %v1156, %v1155
      %v1194 = vpack.c.b16 %v1158, %v1157
      %1231 = vst [vmem:[#allocation8] sm:$0xff] %v1159
      %1232 = vst [vmem:[#allocation8 + $0x8] sm:$0xff] %v1160
      %1233 = vst [vmem:[#allocation8 + $0x10] sm:$0xff] %v1161
      %1234 = vst [vmem:[#allocation8 + $0x18] sm:$0xff] %v1162
      %1235 = vst [vmem:[#allocation8 + $0x20] sm:$0xff] %v1163
      %1236 = vst [vmem:[#allocation8 + $0x28] sm:$0xff] %v1164
      %1237 = vst [vmem:[#allocation8 + $0x30] sm:$0xff] %v1165
      %1238 = vst [vmem:[#allocation8 + $0x38] sm:$0xff] %v1166
      %1239 = vst [vmem:[#allocation8 + $0x40] sm:$0xff] %v1167
      %1240 = vst [vmem:[#allocation8 + $0x48] sm:$0xff] %v1168
      %1241 = vst [vmem:[#allocation8 + $0x50] sm:$0xff] %v1169
      %1242 = vst [vmem:[#allocation8 + $0x58] sm:$0xff] %v1170
      %1243 = vst [vmem:[#allocation8 + $0x60] sm:$0xff] %v1171
      %1244 = vst [vmem:[#allocation8 + $0x68] sm:$0xff] %v1172
      %1245 = vst [vmem:[#allocation8 + $0x70] sm:$0xff] %v1173
      %1246 = vst [vmem:[#allocation8 + $0x78] sm:$0xff] %v1174
      %1247 = vst [vmem:[#allocation8 + $0x80] sm:$0xff] %v1175
      %1248 = vst [vmem:[#allocation8 + $0x88] sm:$0xff] %v1176
      %1249 = vst [vmem:[#allocation8 + $0x90] sm:$0xff] %v1177
      %1250 = vst [vmem:[#allocation8 + $0x98] sm:$0xff] %v1178
      %1251 = vst [vmem:[#allocation8 + $0xa0] sm:$0xff] %v1179
      %1252 = vst [vmem:[#allocation8 + $0xa8] sm:$0xff] %v1180
      %1253 = vst [vmem:[#allocation8 + $0xb0] sm:$0xff] %v1181
      %1254 = vst [vmem:[#allocation8 + $0xb8] sm:$0xff] %v1182
      %1255 = vst [vmem:[#allocation8 + $0xc0] sm:$0xff] %v1183
      %1256 = vst [vmem:[#allocation8 + $0xc8] sm:$0xff] %v1184
      %1257 = vst [vmem:[#allocation8 + $0xd0] sm:$0xff] %v1185
      %1258 = vst [vmem:[#allocation8 + $0xd8] sm:$0xff] %v1186
      %1259 = vst [vmem:[#allocation8 + $0xe0] sm:$0xff] %v1187
      %1260 = vst [vmem:[#allocation8 + $0xe8] sm:$0xff] %v1188
      %1261 = vst [vmem:[#allocation8 + $0xf0] sm:$0xff] %v1189
      %1262 = vst [vmem:[#allocation8 + $0xf8] sm:$0xff] %v1190
      %1263 = vst [vmem:[#allocation8 + $0x100] sm:$0xff] %v1191
      %1264 = vst [vmem:[#allocation8 + $0x108] sm:$0xff] %v1192
      %1265 = vst [vmem:[#allocation8 + $0x110] sm:$0xff] %v1193
      %1266 = vst [vmem:[#allocation8 + $0x118] sm:$0xff] %v1194
    $region29: #{tpu_custom_call.1} parent=1 // pred_fallthru
      _
    // Predicated region
    $region30: #{tpu_custom_call.1} parent=1 // pred_check
      _
    $region31: #{tpu_custom_call.1} parent=1 // pred_check_branch
      %1268 = sbr.rel (0) target = $region33
    $region32: #{tpu_custom_call.1} parent=1 // pred_region
      %s1270 = ssub.s32 4608, 4608
      %1271 = vsyncadd [#allocation5], %s1270
      %s1272 = sshll.u32 [#allocation8], 4
      %s1273 = int_to_ptr.vmem [resolvable:$true] %s1272
      %1278 = dma.vmem_to_hbm [thread:$0]  %s1273, 4608, %s3, [#allocation5], 256, 256, 16
    $region33: #{tpu_custom_call.1} parent=1 // pred_fallthru
      _
    // Predicated region
    $region34: #{tpu_custom_call.1} parent=1 // pred_check
      _
    $region35: #{tpu_custom_call.1} parent=1 // pred_check_branch
      %1280 = sbr.rel (0) target = $region37
    $region36: #{tpu_custom_call.1} parent=1 // pred_region
      %1281 = dma.done [#allocation5], 4608
    $region37: #{tpu_custom_call.1} parent=1 // pred_fallthru
      _
    %1282 = vsyncpa [#allocation4], 1
    %1283 = vsyncpa [#allocation7], 1
    %1284 = vsyncpa [#allocation5], 1

</llo_original>
